<compile_context>
chip_gen: v5e
topology: v5e:2x2
jax: 0.10.0
libtpu: 0.0.40
codegen_flags: <defaults>
</compile_context>

<pallas_src>
import functools
import math

import jax
import jax.numpy as jnp
from jax import lax
from jax.experimental import pallas as pl
from jax.experimental.pallas import tpu as pltpu

_LOG2E = 1.4426950408889634


def _lane_bcast(x, n):
    """x: (rows, w) with all lanes equal -> (rows, n)."""
    w = x.shape[-1]
    if n == w:
        return x
    if n < w:
        return x[:, :n]
    if n % w == 0:
        return jnp.tile(x, (1, n // w))
    return jnp.broadcast_to(x[:, :1], (x.shape[0], n))


def _flash_attention_kernel(q_ref, k_ref, v_ref, mask_ref, o_ref,
                            q_sc, m_sc, l_sc, acc_sc,
                            *, scale_log2e, hg, dim, compute_dtype):
    ki = pl.program_id(3)

    @pl.when(ki == 0)
    def _init():
        # Cache Q * (log2(e)/sqrt(head_dim)) once per q tile (re-used each kv step).
        q = q_ref[0].astype(q_sc.dtype)
        q_sc[...] = q * jnp.asarray(scale_log2e, dtype=q_sc.dtype)
        m_sc[...] = jnp.full(m_sc.shape, -jnp.inf, dtype=m_sc.dtype)
        l_sc[...] = jnp.zeros(l_sc.shape, dtype=l_sc.dtype)
        acc_sc[...] = jnp.zeros(acc_sc.shape, dtype=acc_sc.dtype)

    # Additive mask bias in log2 units, computed once per kv tile: (1, tk).
    bias = (mask_ref[0].astype(jnp.float32) - 1.0) * (1000000.0 * _LOG2E)

    for h in range(hg):  # static, small (<= ~128 // D heads), unrolled
        q = q_sc[h]                                            # (tq, D) pre-scaled
        k = k_ref[0, h].astype(compute_dtype)                  # (tk, D)
        v = v_ref[0, h].astype(compute_dtype)                  # (tk, D)

        # scores (log2 units) = (Q*scale*log2e) @ K^T + bias, no K transpose.
        s = lax.dot_general(q, k,
                            dimension_numbers=(((1,), (1,)), ((), ())),
                            preferred_element_type=jnp.float32)   # (tq, tk)
        s = s + bias

        # Online (streaming) softmax update, stats lane-broadcast at width 128.
        m_prev = m_sc[h]                                       # (tq, 128)
        l_prev = l_sc[h]                                       # (tq, 128)
        m_curr = jnp.max(s, axis=-1, keepdims=True)            # (tq, 1)
        m_next = jnp.maximum(m_prev, m_curr)                   # (tq, 128)
        alpha = jnp.exp2(m_prev - m_next)                      # (tq, 128)
        p = jnp.exp2(s - _lane_bcast(m_next, s.shape[-1]))     # (tq, tk)

        l_sc[h] = alpha * l_prev + jnp.sum(p, axis=-1, keepdims=True)
        acc_sc[h] = _lane_bcast(alpha, dim) * acc_sc[h] + jnp.dot(
            p.astype(compute_dtype), v, preferred_element_type=jnp.float32)
        m_sc[h] = m_next

    @pl.when(ki == pl.num_programs(3) - 1)
    def _finalize():
        for h in range(hg):
            l = l_sc[h]
            inv_l = pl.reciprocal(l, approx=True)      # EUP slot
            inv_l = inv_l * (2.0 - l * inv_l)          # one Newton step (keep paired)
            o_ref[0, 0, :, h * dim:(h + 1) * dim] = (
                acc_sc[h] * _lane_bcast(inv_l, dim)).astype(o_ref.dtype)


def _choose_q_tile(s, preferred):
    """Largest q tile <= preferred that divides s and is a multiple of 8 (sublane)."""
    if s <= preferred:
        return s
    for t in range(preferred, 7, -1):
        if s % t == 0 and t % 8 == 0:
            return t
    return s                      # no legal divisor: use the full axis


def _choose_kv_tile(s, preferred):
    """kv tile is also the mask block's lane dim: multiple of 128 (or full s)."""
    if s <= preferred:
        return s
    t = (preferred // 128) * 128
    while t >= 128:
        if s % t == 0:
            return t
        t -= 128
    return s


def _choose_head_group(h, d):
    """Smallest head group whose fused lane width hg*d is a multiple of 128."""
    if d % 128 == 0:
        return 1
    for hg in range(1, h + 1):
        if h % hg == 0 and (hg * d) % 128 == 0:
            return hg
    return 1                      # no such divisor: keep per-head layout


def softmax_attention(Q, K, V, mask, *, head_dim=None, q_block=512, kv_block=512,
                      use_bf16_matmul=False):
    """Pallas TPU implementation of SoftmaxAttention.forward (eval mode)."""
    B, H, S, D = Q.shape
    if head_dim is None:
        head_dim = D
    scale_log2e = _LOG2E / math.sqrt(head_dim)

    tq = _choose_q_tile(S, q_block)
    tk = _choose_kv_tile(S, kv_block)
    n_q = S // tq
    n_k = S // tk
    hg = _choose_head_group(H, D)
    G = H // hg

    # Accuracy-gated: bf16 MXU operands (f32 accumulation / f32 softmax stats).
    # Off by default; only enable if the model tolerates bf16 QK^T precision.
    compute_dtype = jnp.bfloat16 if use_bf16_matmul else Q.dtype

    # (B, 1, S) so the (1, 1, tk) mask block is TPU-tiling legal.
    mask3 = mask.reshape(B, 1, S)

    q_spec = pl.BlockSpec((1, hg, tq, D), lambda b, g, qi, ki: (b, g, qi, 0))
    k_spec = pl.BlockSpec((1, hg, tk, D), lambda b, g, qi, ki: (b, g, ki, 0))
    v_spec = pl.BlockSpec((1, hg, tk, D), lambda b, g, qi, ki: (b, g, ki, 0))
    m_spec = pl.BlockSpec((1, 1, tk), lambda b, g, qi, ki: (b, 0, ki))
    o_spec = pl.BlockSpec((1, 1, tq, hg * D), lambda b, g, qi, ki: (b, g, qi, 0))

    kernel = functools.partial(_flash_attention_kernel, scale_log2e=scale_log2e,
                               hg=hg, dim=D, compute_dtype=compute_dtype)

    itemsize = jnp.dtype(Q.dtype).itemsize
    cost = pl.CostEstimate(
        flops=4 * B * H * S * S * D,
        transcendentals=B * H * S * S,
        bytes_accessed=(
            B * H * S * D * itemsize                 # Q, read once
            + 2 * n_q * B * H * S * D * itemsize     # K and V, re-streamed per q tile
            + B * H * S * D * itemsize               # output, written once
            + n_q * G * B * S * jnp.dtype(mask.dtype).itemsize),
    )

    out = pl.pallas_call(
        kernel,
        out_shape=jax.ShapeDtypeStruct((B, G, S, hg * D), Q.dtype),
        grid_spec=pltpu.PrefetchScalarGridSpec(
            num_scalar_prefetch=0,
            grid=(B, G, n_q, n_k),
            in_specs=[q_spec, k_spec, v_spec, m_spec],
            out_specs=o_spec,
            scratch_shapes=[
                pltpu.VMEM((hg, tq, D), compute_dtype),   # cached scaled Q
                pltpu.VMEM((hg, tq, 128), jnp.float32),   # running max   (lane-bcast)
                pltpu.VMEM((hg, tq, 128), jnp.float32),   # running denom (lane-bcast)
                pltpu.VMEM((hg, tq, D), jnp.float32),     # f32 output accumulator
            ],
        ),
        compiler_params=pltpu.CompilerParams(
            dimension_semantics=("parallel", "parallel", "parallel", "arbitrary"),
        ),
        cost_estimate=cost,
    )(Q, K, V, mask3)

    if hg == 1:
        return out                                    # already [B, H, S, D]
    # Un-interleave the fused head-group lanes back to [B, H, S, D]
    # (layout plumbing only; a fused [B, S, H*D] consumer could skip this).
    return (out.reshape(B, G, S, hg, D)
               .transpose(0, 1, 3, 2, 4)
               .reshape(B, H, S, D))


def _reference(Q, K, V, mask, head_dim):
    dot = jnp.einsum("bhqd,bhkd->bhqk", Q, K,
                     precision=lax.Precision.HIGHEST) / math.sqrt(head_dim)
    dot = dot - 1000000.0 * (1.0 - mask[:, None, None, :])
    attn = jax.nn.softmax(dot, axis=-1)
    return jnp.einsum("bhqk,bhkd->bhqd", attn, V, precision=lax.Precision.HIGHEST)


if __name__ == "__main__":
    # config = {'attention_dropout': 0.0, 'head_dim': 32}
    B, H, S, D = 2, 2, 8, 32
    key = jax.random.PRNGKey(0)
    kq, kk, kv, km = jax.random.split(key, 4)
    Q = jax.random.normal(kq, (B, H, S, D), dtype=jnp.float32)
    K = jax.random.normal(kk, (B, H, S, D), dtype=jnp.float32)
    V = jax.random.normal(kv, (B, H, S, D), dtype=jnp.float32)
    mask = (jax.random.uniform(km, (B, S)) > 0.3).astype(jnp.float32)

    out = jax.block_until_ready(softmax_attention(Q, K, V, mask, head_dim=D))
    ref = _reference(Q, K, V, mask, D)
    assert out.shape == (B, H, S, D)
    assert jnp.allclose(out, ref, atol=1e-3, rtol=1e-3), "mismatch (small)"

    # Tiled online-softmax path, per-head output layout (hg == 1).
    B2, H2, S2, D2 = 1, 2, 256, 32
    kq2, kk2, kv2, km2 = jax.random.split(jax.random.PRNGKey(0), 4)
    Q2 = jax.random.normal(kq2, (B2, H2, S2, D2), dtype=jnp.float32)
    K2 = jax.random.normal(kk2, (B2, H2, S2, D2), dtype=jnp.float32)
    V2 = jax.random.normal(kv2, (B2, H2, S2, D2), dtype=jnp.float32)
    mask2 = (jax.random.uniform(km2, (B2, S2)) > 0.3).astype(jnp.float32)
    out2 = jax.block_until_ready(
        softmax_attention(Q2, K2, V2, mask2, head_dim=D2, q_block=128, kv_block=128))
    ref2 = _reference(Q2, K2, V2, mask2, D2)
    assert out2.shape == (B2, H2, S2, D2)
    assert jnp.allclose(out2, ref2, atol=1e-3, rtol=1e-3), "mismatch (tiled, hg=1)"

    # Grouped-head lane-dense output path (hg = 128 // D = 4) + multiple kv tiles.
    B3, H3, S3, D3 = 1, 4, 256, 32
    kq3, kk3, kv3, km3 = jax.random.split(jax.random.PRNGKey(0), 4)
    Q3 = jax.random.normal(kq3, (B3, H3, S3, D3), dtype=jnp.float32)
    K3 = jax.random.normal(kk3, (B3, H3, S3, D3), dtype=jnp.float32)
    V3 = jax.random.normal(kv3, (B3, H3, S3, D3), dtype=jnp.float32)
    mask3_ = (jax.random.uniform(km3, (B3, S3)) > 0.3).astype(jnp.float32)
    out3 = jax.block_until_ready(
        softmax_attention(Q3, K3, V3, mask3_, head_dim=D3, kv_block=128))
    ref3 = _reference(Q3, K3, V3, mask3_, D3)
    assert out3.shape == (B3, H3, S3, D3)
    assert jnp.allclose(out3, ref3, atol=1e-3, rtol=1e-3), "mismatch (grouped heads)"

    print("KERNEL_OK")
</pallas_src>

<mosaic_0001>
module attributes {stable_mosaic.version = 11 : i64} {
  func.func @_flash_attention_kernel(%arg0: i32, %arg1: i32, %arg2: i32, %arg3: i32, %arg4: memref<1x1x8x32xf32, #tpu.memory_space<vmem>>, %arg5: memref<1x1x8x32xf32, #tpu.memory_space<vmem>>, %arg6: memref<1x1x8x32xf32, #tpu.memory_space<vmem>>, %arg7: memref<1x1x8xf32, #tpu.memory_space<vmem>>, %arg8: memref<1x1x8x32xf32, #tpu.memory_space<vmem>>, %arg9: memref<1x8x32xf32, #tpu.memory_space<vmem>>, %arg10: memref<1x8x128xf32, #tpu.memory_space<vmem>>, %arg11: memref<1x8x128xf32, #tpu.memory_space<vmem>>, %arg12: memref<1x8x32xf32, #tpu.memory_space<vmem>>) attributes {dimension_semantics = [#tpu.dimension_semantics<parallel>, #tpu.dimension_semantics<parallel>, #tpu.dimension_semantics<parallel>, #tpu.dimension_semantics<arbitrary>], iteration_bounds = array<i64: 2, 2, 1, 1>, scalar_prefetch = 0 : i64, scratch_operands = 4 : i64, tpu.core_type = #tpu.core_type<tc>, window_params = [{transform_indices = @transform_0, window_bounds = array<i64: 1, 1, 8, 32>}, {transform_indices = @transform_1, window_bounds = array<i64: 1, 1, 8, 32>}, {transform_indices = @transform_2, window_bounds = array<i64: 1, 1, 8, 32>}, {transform_indices = @transform_3, window_bounds = array<i64: 1, 1, 8>}, {transform_indices = @transform_4, window_bounds = array<i64: 1, 1, 8, 32>}]} {
    %c0_i32 = arith.constant 0 : i32
    %0 = arith.cmpi eq, %arg3, %c0_i32 : i32
    %1 = arith.extui %0 : i1 to i32
    %c0_i32_0 = arith.constant 0 : i32
    %2 = arith.cmpi ne, %1, %c0_i32_0 : i32
    scf.if %2 {
      %c0_39 = arith.constant 0 : index
      %c0_40 = arith.constant 0 : index
      %c0_41 = arith.constant 0 : index
      %c0_42 = arith.constant 0 : index
      %54 = vector.load %arg4[%c0_39, %c0_40, %c0_41, %c0_42] : memref<1x1x8x32xf32, #tpu.memory_space<vmem>>, vector<1x1x8x32xf32>
      %55 = vector.shape_cast %54 : vector<1x1x8x32xf32> to vector<1x8x32xf32>
      %cst_43 = arith.constant 0.255034864 : f32
      %56 = vector.broadcast %cst_43 : f32 to vector<1x8x32xf32>
      %57 = arith.mulf %55, %56 : vector<1x8x32xf32>
      %c0_44 = arith.constant 0 : index
      %c0_45 = arith.constant 0 : index
      %c0_46 = arith.constant 0 : index
      %58 = vector.load %arg9[%c0_44, %c0_45, %c0_46] : memref<1x8x32xf32, #tpu.memory_space<vmem>>, vector<1x8x32xf32>
      tpu.vector_store %arg9[%c0_44, %c0_45, %c0_46], %57 {strides = array<i32>} : memref<1x8x32xf32, #tpu.memory_space<vmem>>, vector<1x8x32xf32>,
      %cst_47 = arith.constant 0xFF800000 : f32
      %59 = vector.broadcast %cst_47 : f32 to vector<1x8x128xf32>
      %c0_48 = arith.constant 0 : index
      %c0_49 = arith.constant 0 : index
      %c0_50 = arith.constant 0 : index
      %60 = vector.load %arg10[%c0_48, %c0_49, %c0_50] : memref<1x8x128xf32, #tpu.memory_space<vmem>>, vector<1x8x128xf32>
      tpu.vector_store %arg10[%c0_48, %c0_49, %c0_50], %59 {strides = array<i32>} : memref<1x8x128xf32, #tpu.memory_space<vmem>>, vector<1x8x128xf32>,
      %cst_51 = arith.constant 0.000000e+00 : f32
      %61 = vector.broadcast %cst_51 : f32 to vector<1x8x128xf32>
      %c0_52 = arith.constant 0 : index
      %c0_53 = arith.constant 0 : index
      %c0_54 = arith.constant 0 : index
      %62 = vector.load %arg11[%c0_52, %c0_53, %c0_54] : memref<1x8x128xf32, #tpu.memory_space<vmem>>, vector<1x8x128xf32>
      tpu.vector_store %arg11[%c0_52, %c0_53, %c0_54], %61 {strides = array<i32>} : memref<1x8x128xf32, #tpu.memory_space<vmem>>, vector<1x8x128xf32>,
      %cst_55 = arith.constant 0.000000e+00 : f32
      %63 = vector.broadcast %cst_55 : f32 to vector<1x8x32xf32>
      %c0_56 = arith.constant 0 : index
      %c0_57 = arith.constant 0 : index
      %c0_58 = arith.constant 0 : index
      %64 = vector.load %arg12[%c0_56, %c0_57, %c0_58] : memref<1x8x32xf32, #tpu.memory_space<vmem>>, vector<1x8x32xf32>
      tpu.vector_store %arg12[%c0_56, %c0_57, %c0_58], %63 {strides = array<i32>} : memref<1x8x32xf32, #tpu.memory_space<vmem>>, vector<1x8x32xf32>,
    } else {
    }
    %c0 = arith.constant 0 : index
    %c0_1 = arith.constant 0 : index
    %c0_2 = arith.constant 0 : index
    %3 = vector.load %arg7[%c0, %c0_1, %c0_2] : memref<1x1x8xf32, #tpu.memory_space<vmem>>, vector<1x1x8xf32>
    %4 = vector.shape_cast %3 : vector<1x1x8xf32> to vector<1x8xf32>
    %cst = arith.constant 1.000000e+00 : f32
    %5 = vector.broadcast %cst : f32 to vector<1x8xf32>
    %6 = arith.subf %4, %5 : vector<1x8xf32>
    %cst_3 = arith.constant 0x49B01C38 : f32
    %7 = vector.broadcast %cst_3 : f32 to vector<1x8xf32>
    %8 = arith.mulf %6, %7 : vector<1x8xf32>
    %c0_4 = arith.constant 0 : index
    %c0_5 = arith.constant 0 : index
    %c0_6 = arith.constant 0 : index
    %9 = vector.load %arg9[%c0_4, %c0_5, %c0_6] : memref<1x8x32xf32, #tpu.memory_space<vmem>>, vector<1x8x32xf32>
    %10 = vector.shape_cast %9 : vector<1x8x32xf32> to vector<8x32xf32>
    %c0_7 = arith.constant 0 : index
    %c0_8 = arith.constant 0 : index
    %c0_9 = arith.constant 0 : index
    %c0_10 = arith.constant 0 : index
    %11 = vector.load %arg5[%c0_7, %c0_8, %c0_9, %c0_10] : memref<1x1x8x32xf32, #tpu.memory_space<vmem>>, vector<1x1x8x32xf32>
    %12 = vector.shape_cast %11 : vector<1x1x8x32xf32> to vector<8x32xf32>
    %c0_11 = arith.constant 0 : index
    %c0_12 = arith.constant 0 : index
    %c0_13 = arith.constant 0 : index
    %c0_14 = arith.constant 0 : index
    %13 = vector.load %arg6[%c0_11, %c0_12, %c0_13, %c0_14] : memref<1x1x8x32xf32, #tpu.memory_space<vmem>>, vector<1x1x8x32xf32>
    %14 = vector.shape_cast %13 : vector<1x1x8x32xf32> to vector<8x32xf32>
    %cst_15 = arith.constant dense<0.000000e+00> : vector<8x8xf32>
    %15 = tpu.matmul %10, %12, %cst_15 {dimension_numbers = #tpu.dot_dimension_numbers<[1], [1], [0], [0], [0, 0, 1, 0], [], []>} : vector<8x32xf32>, vector<8x32xf32>, vector<8x8xf32> -> vector<8x8xf32>
    %16 = vector.broadcast %8 : vector<1x8xf32> to vector<8x8xf32>
    %17 = arith.addf %15, %16 : vector<8x8xf32>
    %c0_16 = arith.constant 0 : index
    %c0_17 = arith.constant 0 : index
    %c0_18 = arith.constant 0 : index
    %18 = vector.load %arg10[%c0_16, %c0_17, %c0_18] : memref<1x8x128xf32, #tpu.memory_space<vmem>>, vector<1x8x128xf32>
    %19 = vector.shape_cast %18 : vector<1x8x128xf32> to vector<8x128xf32>
    %c0_19 = arith.constant 0 : index
    %c0_20 = arith.constant 0 : index
    %c0_21 = arith.constant 0 : index
    %20 = vector.load %arg11[%c0_19, %c0_20, %c0_21] : memref<1x8x128xf32, #tpu.memory_space<vmem>>, vector<1x8x128xf32>
    %21 = vector.shape_cast %20 : vector<1x8x128xf32> to vector<8x128xf32>
    %cst_22 = arith.constant dense<0xFF800000> : vector<8xf32>
    %22 = vector.multi_reduction <maximumf>, %17, %cst_22 [1] : vector<8x8xf32> to vector<8xf32>
    %23 = vector.shape_cast %22 : vector<8xf32> to vector<8x1xf32>
    %24 = vector.broadcast %23 : vector<8x1xf32> to vector<8x128xf32>
    %25 = arith.maximumf %19, %24 : vector<8x128xf32>
    %26 = arith.subf %19, %25 : vector<8x128xf32>
    %27 = math.exp2 %26 : vector<8x128xf32>
    %28 = vector.extract_strided_slice %25 {offsets = [0, 0], sizes = [8, 8], strides = [1, 1]} : vector<8x128xf32> to vector<8x8xf32>
    %29 = arith.subf %17, %28 : vector<8x8xf32>
    %30 = math.exp2 %29 : vector<8x8xf32>
    %31 = arith.mulf %27, %21 : vector<8x128xf32>
    %cst_23 = arith.constant dense<0.000000e+00> : vector<8xf32>
    %32 = vector.multi_reduction <add>, %30, %cst_23 [1] : vector<8x8xf32> to vector<8xf32>
    %33 = vector.shape_cast %32 : vector<8xf32> to vector<8x1xf32>
    %34 = vector.broadcast %33 : vector<8x1xf32> to vector<8x128xf32>
    %35 = arith.addf %31, %34 : vector<8x128xf32>
    %c0_24 = arith.constant 0 : index
    %c0_25 = arith.constant 0 : index
    %c0_26 = arith.constant 0 : index
    %36 = vector.load %arg11[%c0_24, %c0_25, %c0_26] : memref<1x8x128xf32, #tpu.memory_space<vmem>>, vector<1x8x128xf32>
    %37 = vector.shape_cast %36 : vector<1x8x128xf32> to vector<8x128xf32>
    %38 = vector.shape_cast %35 : vector<8x128xf32> to vector<1x8x128xf32>
    tpu.vector_store %arg11[%c0_24, %c0_25, %c0_26], %38 {strides = array<i32>} : memref<1x8x128xf32, #tpu.memory_space<vmem>>, vector<1x8x128xf32>,
    %39 = vector.extract_strided_slice %27 {offsets = [0, 0], sizes = [8, 32], strides = [1, 1]} : vector<8x128xf32> to vector<8x32xf32>
    %c0_27 = arith.constant 0 : index
    %c0_28 = arith.constant 0 : index
    %c0_29 = arith.constant 0 : index
    %40 = vector.load %arg12[%c0_27, %c0_28, %c0_29] : memref<1x8x32xf32, #tpu.memory_space<vmem>>, vector<1x8x32xf32>
    %41 = vector.shape_cast %40 : vector<1x8x32xf32> to vector<8x32xf32>
    %42 = arith.mulf %39, %41 : vector<8x32xf32>
    %cst_30 = arith.constant dense<0.000000e+00> : vector<8x32xf32>
    %43 = tpu.matmul %30, %14, %cst_30 {dimension_numbers = #tpu.dot_dimension_numbers<[1], [0], [0], [1], [0, 0, 1, 1], [], []>} : vector<8x8xf32>, vector<8x32xf32>, vector<8x32xf32> -> vector<8x32xf32>
    %44 = arith.addf %42, %43 : vector<8x32xf32>
    %c0_31 = arith.constant 0 : index
    %c0_32 = arith.constant 0 : index
    %c0_33 = arith.constant 0 : index
    %45 = vector.load %arg12[%c0_31, %c0_32, %c0_33] : memref<1x8x32xf32, #tpu.memory_space<vmem>>, vector<1x8x32xf32>
    %46 = vector.shape_cast %45 : vector<1x8x32xf32> to vector<8x32xf32>
    %47 = vector.shape_cast %44 : vector<8x32xf32> to vector<1x8x32xf32>
    tpu.vector_store %arg12[%c0_31, %c0_32, %c0_33], %47 {strides = array<i32>} : memref<1x8x32xf32, #tpu.memory_space<vmem>>, vector<1x8x32xf32>,
    %c0_34 = arith.constant 0 : index
    %c0_35 = arith.constant 0 : index
    %c0_36 = arith.constant 0 : index
    %48 = vector.load %arg10[%c0_34, %c0_35, %c0_36] : memref<1x8x128xf32, #tpu.memory_space<vmem>>, vector<1x8x128xf32>
    %49 = vector.shape_cast %48 : vector<1x8x128xf32> to vector<8x128xf32>
    %50 = vector.shape_cast %25 : vector<8x128xf32> to vector<1x8x128xf32>
    tpu.vector_store %arg10[%c0_34, %c0_35, %c0_36], %50 {strides = array<i32>} : memref<1x8x128xf32, #tpu.memory_space<vmem>>, vector<1x8x128xf32>,
    %c0_i32_37 = arith.constant 0 : i32
    %51 = arith.cmpi eq, %arg3, %c0_i32_37 : i32
    %52 = arith.extui %51 : i1 to i32
    %c0_i32_38 = arith.constant 0 : i32
    %53 = arith.cmpi ne, %52, %c0_i32_38 : i32
    scf.if %53 {
      %c0_39 = arith.constant 0 : index
      %c0_40 = arith.constant 0 : index
      %c0_41 = arith.constant 0 : index
      %54 = vector.load %arg11[%c0_39, %c0_40, %c0_41] : memref<1x8x128xf32, #tpu.memory_space<vmem>>, vector<1x8x128xf32>
      %55 = vector.shape_cast %54 : vector<1x8x128xf32> to vector<8x128xf32>
      %56 = tpu.reciprocal %55 {approx = true} : vector<8x128xf32> -> vector<8x128xf32>
      %57 = arith.mulf %55, %56 : vector<8x128xf32>
      %cst_42 = arith.constant 2.000000e+00 : f32
      %58 = vector.broadcast %cst_42 : f32 to vector<8x128xf32>
      %59 = arith.subf %58, %57 : vector<8x128xf32>
      %60 = arith.mulf %56, %59 : vector<8x128xf32>
      %c0_43 = arith.constant 0 : index
      %c0_44 = arith.constant 0 : index
      %c0_45 = arith.constant 0 : index
      %61 = vector.load %arg12[%c0_43, %c0_44, %c0_45] : memref<1x8x32xf32, #tpu.memory_space<vmem>>, vector<1x8x32xf32>
      %62 = vector.shape_cast %61 : vector<1x8x32xf32> to vector<8x32xf32>
      %63 = vector.extract_strided_slice %60 {offsets = [0, 0], sizes = [8, 32], strides = [1, 1]} : vector<8x128xf32> to vector<8x32xf32>
      %64 = arith.mulf %62, %63 : vector<8x32xf32>
      %c0_46 = arith.constant 0 : index
      %c0_47 = arith.constant 0 : index
      %c0_48 = arith.constant 0 : index
      %c0_49 = arith.constant 0 : index
      %65 = vector.load %arg8[%c0_46, %c0_47, %c0_48, %c0_49] : memref<1x1x8x32xf32, #tpu.memory_space<vmem>>, vector<1x1x8x32xf32>
      %66 = vector.shape_cast %65 : vector<1x1x8x32xf32> to vector<8x32xf32>
      %67 = vector.shape_cast %64 : vector<8x32xf32> to vector<1x1x8x32xf32>
      tpu.vector_store %arg8[%c0_46, %c0_47, %c0_48, %c0_49], %67 {strides = array<i32>} : memref<1x1x8x32xf32, #tpu.memory_space<vmem>>, vector<1x1x8x32xf32>,
    } else {
    }
    return
  }
  func.func @transform_0(%arg0: i32, %arg1: i32, %arg2: i32, %arg3: i32) -> (i32, i32, i32, i32) {
    %c0_i32 = arith.constant 0 : i32
    %c0_i32_0 = arith.constant 0 : i32
    return %arg0, %arg1, %arg2, %c0_i32 : i32, i32, i32, i32
  }
  func.func @transform_1(%arg0: i32, %arg1: i32, %arg2: i32, %arg3: i32) -> (i32, i32, i32, i32) {
    %c0_i32 = arith.constant 0 : i32
    %c0_i32_0 = arith.constant 0 : i32
    return %arg0, %arg1, %arg3, %c0_i32 : i32, i32, i32, i32
  }
  func.func @transform_2(%arg0: i32, %arg1: i32, %arg2: i32, %arg3: i32) -> (i32, i32, i32, i32) {
    %c0_i32 = arith.constant 0 : i32
    %c0_i32_0 = arith.constant 0 : i32
    return %arg0, %arg1, %arg3, %c0_i32 : i32, i32, i32, i32
  }
  func.func @transform_3(%arg0: i32, %arg1: i32, %arg2: i32, %arg3: i32) -> (i32, i32, i32) {
    %c0_i32 = arith.constant 0 : i32
    %c0_i32_0 = arith.constant 0 : i32
    return %arg0, %c0_i32, %arg3 : i32, i32, i32
  }
  func.func @transform_4(%arg0: i32, %arg1: i32, %arg2: i32, %arg3: i32) -> (i32, i32, i32, i32) {
    %c0_i32 = arith.constant 0 : i32
    %c0_i32_0 = arith.constant 0 : i32
    return %arg0, %arg1, %arg2, %c0_i32 : i32, i32, i32, i32
  }
}

</mosaic_0001>

<llo_original>
// kernel: tpu_custom_call.1
$region0: #{tpu_custom_call.1}
  #allocation0 [shape = 'u32[]', space=smem, size = 0x4, offset = 0x4, fixed_abs, tag = 'smem constant byte address 0x4 - core index']
  #allocation1 [shape = 'u32[72,128]{1,0:T(1,128)}', space=vmem, size = 0x9000, scoped, tag = 'internal scratch']
  #allocation2 [shape = 'f32[1,8,32]{2,1,0:T(8,128)}', space=vmem, size = 0x1000, scoped, tag = 'scratch operand']
  #allocation3 [shape = 'f32[1,8,128]{2,1,0:T(8,128)}', space=vmem, size = 0x1000, scoped, tag = 'scratch operand']
  #allocation4 [shape = 'f32[1,8,128]{2,1,0:T(8,128)}', space=vmem, size = 0x1000, scoped, tag = 'scratch operand']
  #allocation5 [shape = 'f32[1,8,32]{2,1,0:T(8,128)}', space=vmem, size = 0x1000, scoped, tag = 'scratch operand']
  %s0 = inlined_call_operand.hbm [shape: f32[2,2,8,32], index: 0, kind: input, shape index: {}]
  %s1 = inlined_call_operand.hbm [shape: f32[2,2,8,32], index: 1, kind: input, shape index: {}]
  %s2 = inlined_call_operand.hbm [shape: f32[2,2,8,32], index: 2, kind: input, shape index: {}]
  %s3 = inlined_call_operand.vmem [shape: f32[2,1,8], index: 3, kind: input, shape index: {}]
  %s4 = inlined_call_operand.hbm [shape: f32[2,2,8,32], index: 4, kind: output, shape index: {}]
  %s5 = sld [smem:[#allocation0]]
  $region69: #{tpu_custom_call.1} parent=0
    _
  %s7 = ssub.s32 1, %s5
  %s8 = scalar_select 0, %s7, %s5
  $region1: #{tpu_custom_call.1} parent=0
    #allocation6 [shape = 'u8[8192]{0}', space=vmem, size = 0x2000, scoped, tag = 'input window, operand 0']
    #allocation7 [shape = 's32[2]{0}', space=sflag, size = 0x8, scoped, tag = 'scoped memory for tpu_custom_call.1']
    #allocation8 [shape = 's32[2]{0}', space=sflag, size = 0x8, scoped, tag = 'scoped memory for tpu_custom_call.1']
    #allocation9 [shape = 'u8[8192]{0}', space=vmem, size = 0x2000, scoped, tag = 'input window, operand 1']
    #allocation10 [shape = 's32[2]{0}', space=sflag, size = 0x8, scoped, tag = 'scoped memory for tpu_custom_call.1']
    #allocation11 [shape = 'u8[8192]{0}', space=vmem, size = 0x2000, scoped, tag = 'input window, operand 2']
    #allocation12 [shape = 'u8[8192]{0}', space=vmem, size = 0x2000, scoped, tag = 'output window, operand 0']
    %9 = vsyncpa [#allocation7], 0
    %s10 = scalar_lea.sflag [#allocation7], 1
    %11 = vsyncpa %s10, 0
    %12 = vsyncpa [#allocation10], 0
    %s13 = scalar_lea.sflag [#allocation10], 1
    %14 = vsyncpa %s13, 0
    %15 = vsyncpa [#allocation8], 0
    %s16 = scalar_lea.sflag [#allocation8], 1
    %17 = vsyncpa %s16, 0
    loop: start=0, step=1, limit=6
    $region2: #{tpu_custom_call.1} parent=1 // loop_pre_header
      _
    $region3: #{tpu_custom_call.1} parent=1 // loop_header
      %s19 = sphi 0, %s23
      %p20 = scmp.ge.s32.totalorder %s19, 6
      %s26 = sphi 0, %s52
      %s27 = sphi 0, %s48
      %s28 = sphi 0, %s44
      %s29 = sphi 0, %s40
      %s30 = sphi 0, %s26
      %s31 = sphi 0, %s27
      %s32 = sphi 0, %s28
      %s33 = sphi 0, %s29
      %s34 = sphi 0, %s30
      %s35 = sphi 0, %s31
      %s36 = sphi 0, %s32
      %s37 = sphi 0, %s33
      %s59 = sphi 0, %s61
      %s62 = sphi 0, %s59
      %s63 = sphi 0, %s62
      %s79 = sphi 0, %s63
      %s89 = sphi 0, %s91
      %s92 = sphi 0, %s89
      %s93 = sphi 0, %s92
      %s109 = sphi 0, %s93
      %s119 = sphi 0, %s121
      %s122 = sphi 0, %s119
      %s123 = sphi 0, %s122
      %s139 = sphi 0, %s123
      %s147 = sphi 0, %s149
      %s150 = sphi 0, %s147
      %s151 = sphi 0, %s150
      %s167 = sphi 0, %s151
      %s177 = sphi 0, %s179
      %s180 = sphi 0, %s177
      %s181 = sphi 0, %s180
      %s197 = sphi 0, %s181
    $region4: #{tpu_custom_call.1} parent=1 // loop_header_branch
      %22 = sbr.rel (%p20) target = $region8
    $region5: #{tpu_custom_call.1} parent=1 // loop_body
      %s24 = ssub.s32 %s19, 1
      %s25 = ssub.s32 %s19, 2
      %s38 = sadd.s32 1, %s29
      %p39 = scmp.ge.s32.totalorder %s38, 1
      %s40 = scalar_select %p39, 0, %s38
      %s41 = sadd.s32 1, %s28
      %s42 = scalar_select %p39, %s41, %s28
      %p43 = scmp.ge.s32.totalorder %s42, 1
      %s44 = scalar_select %p43, 0, %s42
      %s45 = sadd.s32 1, %s27
      %s46 = scalar_select %p43, %s45, %s27
      %p47 = scmp.ge.s32.totalorder %s46, 2
      %s48 = scalar_select %p47, 0, %s46
      %s49 = sadd.s32 1, %s26
      %s50 = scalar_select %p47, %s49, %s26
      %p51 = scmp.ge.s32.totalorder %s50, 2
      %s52 = scalar_select %p51, 0, %s50
      %s53 = ssub.s32 %s26, %s52
      %s54 = ssub.s32 %s27, %s48
      %s55 = sor.u32 %s53, %s54
      %s56 = ssub.s32 %s28, %s44
      %s57 = sor.u32 %s55, %s56
      %p58 = scmp.eq.s32.totalorder %s57, 0
      %s60 = sadd.s32 %s59, 1
      %s61 = scalar_select %p58, %s59, %s60
      %p64 = pneg %p58
      %p65 = scmp.eq.s32.totalorder %s19, 3
      %p66 = por %p64, %p65
      %p67 = scmp.ne.s32.totalorder %s59, %s62
      %p68 = scmp.eq.s32.totalorder %s19, 0
      %p69 = por %p67, %p68
      %p70 = scmp.ne.s32.totalorder %s59, %s62
      %p71 = scmp.eq.s32.totalorder %s24, 3
      %p72 = por %p70, %p71
      %p73 = scmp.ne.s32.totalorder %s62, %s63
      %p74 = scmp.eq.s32.totalorder %s24, 0
      %p75 = por %p73, %p74
      %p76 = scmp.ne.s32.totalorder %s62, %s63
      %p77 = scmp.eq.s32.totalorder %s25, 3
      %p78 = por %p76, %p77
      %p80 = scmp.ne.s32.totalorder %s63, %s79
      %p81 = scmp.eq.s32.totalorder %s25, 0
      %p82 = por %p80, %p81
      %s83 = ssub.s32 %s26, %s52
      %s84 = ssub.s32 %s27, %s48
      %s85 = sor.u32 %s83, %s84
      %s86 = ssub.s32 %s29, %s40
      %s87 = sor.u32 %s85, %s86
      %p88 = scmp.eq.s32.totalorder %s87, 0
      %s90 = sadd.s32 %s89, 1
      %s91 = scalar_select %p88, %s89, %s90
      %p94 = pneg %p88
      %p95 = scmp.eq.s32.totalorder %s19, 3
      %p96 = por %p94, %p95
      %p97 = scmp.ne.s32.totalorder %s89, %s92
      %p98 = scmp.eq.s32.totalorder %s19, 0
      %p99 = por %p97, %p98
      %p100 = scmp.ne.s32.totalorder %s89, %s92
      %p101 = scmp.eq.s32.totalorder %s24, 3
      %p102 = por %p100, %p101
      %p103 = scmp.ne.s32.totalorder %s92, %s93
      %p104 = scmp.eq.s32.totalorder %s24, 0
      %p105 = por %p103, %p104
      %p106 = scmp.ne.s32.totalorder %s92, %s93
      %p107 = scmp.eq.s32.totalorder %s25, 3
      %p108 = por %p106, %p107
      %p110 = scmp.ne.s32.totalorder %s93, %s109
      %p111 = scmp.eq.s32.totalorder %s25, 0
      %p112 = por %p110, %p111
      %s113 = ssub.s32 %s26, %s52
      %s114 = ssub.s32 %s27, %s48
      %s115 = sor.u32 %s113, %s114
      %s116 = ssub.s32 %s29, %s40
      %s117 = sor.u32 %s115, %s116
      %p118 = scmp.eq.s32.totalorder %s117, 0
      %s120 = sadd.s32 %s119, 1
      %s121 = scalar_select %p118, %s119, %s120
      %p124 = pneg %p118
      %p125 = scmp.eq.s32.totalorder %s19, 3
      %p126 = por %p124, %p125
      %p127 = scmp.ne.s32.totalorder %s119, %s122
      %p128 = scmp.eq.s32.totalorder %s19, 0
      %p129 = por %p127, %p128
      %p130 = scmp.ne.s32.totalorder %s119, %s122
      %p131 = scmp.eq.s32.totalorder %s24, 3
      %p132 = por %p130, %p131
      %p133 = scmp.ne.s32.totalorder %s122, %s123
      %p134 = scmp.eq.s32.totalorder %s24, 0
      %p135 = por %p133, %p134
      %p136 = scmp.ne.s32.totalorder %s122, %s123
      %p137 = scmp.eq.s32.totalorder %s25, 3
      %p138 = por %p136, %p137
      %p140 = scmp.ne.s32.totalorder %s123, %s139
      %p141 = scmp.eq.s32.totalorder %s25, 0
      %p142 = por %p140, %p141
      %s143 = ssub.s32 %s26, %s52
      %s144 = ssub.s32 %s29, %s40
      %s145 = sor.u32 %s143, %s144
      %p146 = scmp.eq.s32.totalorder %s145, 0
      %s148 = sadd.s32 %s147, 1
      %s149 = scalar_select %p146, %s147, %s148
      %p152 = pneg %p146
      %p153 = scmp.eq.s32.totalorder %s19, 3
      %p154 = por %p152, %p153
      %p155 = scmp.ne.s32.totalorder %s147, %s150
      %p156 = scmp.eq.s32.totalorder %s19, 0
      %p157 = por %p155, %p156
      %p158 = scmp.ne.s32.totalorder %s147, %s150
      %p159 = scmp.eq.s32.totalorder %s24, 3
      %p160 = por %p158, %p159
      %p161 = scmp.ne.s32.totalorder %s150, %s151
      %p162 = scmp.eq.s32.totalorder %s24, 0
      %p163 = por %p161, %p162
      %p164 = scmp.ne.s32.totalorder %s150, %s151
      %p165 = scmp.eq.s32.totalorder %s25, 3
      %p166 = por %p164, %p165
      %p168 = scmp.ne.s32.totalorder %s151, %s167
      %p169 = scmp.eq.s32.totalorder %s25, 0
      %p170 = por %p168, %p169
      %s171 = ssub.s32 %s26, %s52
      %s172 = ssub.s32 %s27, %s48
      %s173 = sor.u32 %s171, %s172
      %s174 = ssub.s32 %s28, %s44
      %s175 = sor.u32 %s173, %s174
      %p176 = scmp.eq.s32.totalorder %s175, 0
      %s178 = sadd.s32 %s177, 1
      %s179 = scalar_select %p176, %s177, %s178
      %p182 = pneg %p176
      %p183 = scmp.eq.s32.totalorder %s19, 3
      %p184 = por %p182, %p183
      %p185 = scmp.ne.s32.totalorder %s177, %s180
      %p186 = scmp.eq.s32.totalorder %s19, 0
      %p187 = por %p185, %p186
      %p188 = scmp.ne.s32.totalorder %s177, %s180
      %p189 = scmp.eq.s32.totalorder %s24, 3
      %p190 = por %p188, %p189
      %p191 = scmp.ne.s32.totalorder %s180, %s181
      %p192 = scmp.eq.s32.totalorder %s24, 0
      %p193 = por %p191, %p192
      %p194 = scmp.ne.s32.totalorder %s180, %s181
      %p195 = scmp.eq.s32.totalorder %s25, 3
      %p196 = por %p194, %p195
      %p198 = scmp.ne.s32.totalorder %s181, %s197
      %p199 = scmp.eq.s32.totalorder %s25, 0
      %p200 = por %p198, %p199
      %p201 = scmp.le.s32.totalorder 1, %s19
      %p202 = scmp.lt.s32.totalorder %s19, 5
      %p203 = pnand %p201, %p202
      %p204 = pneg %p203
      // Predicated region
      $region9: #{tpu_custom_call.1} parent=5 // pred_check
        _
      $region10: #{tpu_custom_call.1} parent=5 // pred_check_branch
        %206 = sbr.rel (%p203) target = $region12
      $region11: #{tpu_custom_call.1} parent=5 // pred_region
        %s207 = ssub.s32 %s19, 1
      $region12: #{tpu_custom_call.1} parent=5 // pred_fallthru
        _
      %p208 = scmp.lt.s32.totalorder %s19, 4
      // Predicated region
      $region13: #{tpu_custom_call.1} parent=5 // pred_check
        %p209 = pneg %p208
      $region14: #{tpu_custom_call.1} parent=5 // pred_check_branch
        %211 = sbr.rel (%p209) target = $region16
      $region15: #{tpu_custom_call.1} parent=5 // pred_region
        // Predicated region
        $region17: #{tpu_custom_call.1} parent=15 // pred_check
          %p212 = pneg %p69
        $region18: #{tpu_custom_call.1} parent=15 // pred_check_branch
          %214 = sbr.rel (%p212) target = $region20
        $region19: #{tpu_custom_call.1} parent=15 // pred_region
          %s215 = sand.u32 %s59, 1
          %s216 = scalar_lea.sflag [#allocation7], %s215
          %s217 = sand.u32 %s59, 1
          %s218 = smul.addr %s217, 8
          %s219 = scalar_lea.vmem [#allocation6], %s218
          %221 = vsyncadd %s216, 0
          %s222 = sadd.s32 %s28, %s27
          %s223 = smul.addr %s26, 2
          %s224 = sadd.s32 %s222, %s223
          %s225 = smul.addr %s224, 8
          %s226 = scalar_lea.hbm %s0, %s225
          %s228 = sshll.u32 %s226, 4
          %s229 = int_to_ptr.hbm [resolvable:$true] %s228
          %s230 = sshll.u32 %s219, 4
          %s231 = int_to_ptr.vmem [resolvable:$true] %s230
          %233 = dma.hbm_to_vmem [thread:$0]  %s229, 128, %s231, %s216
        $region20: #{tpu_custom_call.1} parent=15 // pred_fallthru
          _
        // Predicated region
        $region21: #{tpu_custom_call.1} parent=15 // pred_check
          %p234 = pneg %p99
        $region22: #{tpu_custom_call.1} parent=15 // pred_check_branch
          %236 = sbr.rel (%p234) target = $region24
        $region23: #{tpu_custom_call.1} parent=15 // pred_region
          %s237 = sand.u32 %s19, 1
          %s238 = scalar_lea.sflag [#allocation10], %s237
          %s239 = sand.u32 %s89, 1
          %s240 = smul.addr %s239, 8
          %s241 = scalar_lea.vmem [#allocation9], %s240
          %243 = vsyncadd %s238, 0
          %s244 = sadd.s32 %s29, %s27
          %s245 = smul.addr %s26, 2
          %s246 = sadd.s32 %s244, %s245
          %s247 = smul.addr %s246, 8
          %s248 = scalar_lea.hbm %s1, %s247
          %s250 = sshll.u32 %s248, 4
          %s251 = int_to_ptr.hbm [resolvable:$true] %s250
          %s252 = sshll.u32 %s241, 4
          %s253 = int_to_ptr.vmem [resolvable:$true] %s252
          %255 = dma.hbm_to_vmem [thread:$0]  %s251, 128, %s253, %s238
        $region24: #{tpu_custom_call.1} parent=15 // pred_fallthru
          _
        // Predicated region
        $region25: #{tpu_custom_call.1} parent=15 // pred_check
          %p256 = pneg %p129
        $region26: #{tpu_custom_call.1} parent=15 // pred_check_branch
          %258 = sbr.rel (%p256) target = $region28
        $region27: #{tpu_custom_call.1} parent=15 // pred_region
          %s259 = sand.u32 %s19, 1
          %s260 = scalar_lea.sflag [#allocation10], %s259
          %s261 = sand.u32 %s119, 1
          %s262 = smul.addr %s261, 8
          %s263 = scalar_lea.vmem [#allocation11], %s262
          %265 = vsyncadd %s260, 0
          %s266 = sadd.s32 %s29, %s27
          %s267 = smul.addr %s26, 2
          %s268 = sadd.s32 %s266, %s267
          %s269 = smul.addr %s268, 8
          %s270 = scalar_lea.hbm %s2, %s269
          %s272 = sshll.u32 %s270, 4
          %s273 = int_to_ptr.hbm [resolvable:$true] %s272
          %s274 = sshll.u32 %s263, 4
          %s275 = int_to_ptr.vmem [resolvable:$true] %s274
          %277 = dma.hbm_to_vmem [thread:$0]  %s273, 128, %s275, %s260
        $region28: #{tpu_custom_call.1} parent=15 // pred_fallthru
          _
        // Predicated region
        $region29: #{tpu_custom_call.1} parent=15 // pred_check
          %p278 = pneg %p157
        $region30: #{tpu_custom_call.1} parent=15 // pred_check_branch
          %280 = sbr.rel (%p278) target = $region32
        $region31: #{tpu_custom_call.1} parent=15 // pred_region
          %p281 = scmp.lt.s32.totalorder %s26, 1
          %s282 = scalar_select %p281, %s26, 1
          %p283 = scmp.lt.s32.totalorder %s29, 0
          %s284 = scalar_select %p283, %s29, 0
          %s285 = sadd.s32 %s284, %s282
          %s286 = scalar_lea.vmem %s3, %s285
        $region32: #{tpu_custom_call.1} parent=15 // pred_fallthru
          _
      $region16: #{tpu_custom_call.1} parent=5 // pred_fallthru
        _
      %p287 = scmp.le.s32.totalorder 1, %s19
      %p288 = scmp.lt.s32.totalorder %s19, 5
      %p289 = pnand %p287, %p288
      %p290 = pneg %p289
      // Predicated region
      $region33: #{tpu_custom_call.1} parent=5 // pred_check
        _
      $region34: #{tpu_custom_call.1} parent=5 // pred_check_branch
        %292 = sbr.rel (%p289) target = $region36
      $region35: #{tpu_custom_call.1} parent=5 // pred_region
        %s293 = ssub.s32 %s19, 1
        %s294 = sand.u32 %s62, 1
        %s295 = scalar_lea.sflag [#allocation7], %s294
        %s296 = sand.u32 %s62, 1
        %s297 = smul.addr %s296, 8
        %s298 = scalar_lea.vmem [#allocation6], %s297
        // Predicated region
        $region37: #{tpu_custom_call.1} parent=35 // pred_check
          %p299 = pneg %p75
        $region38: #{tpu_custom_call.1} parent=35 // pred_check_branch
          %301 = sbr.rel (%p299) target = $region40
        $region39: #{tpu_custom_call.1} parent=35 // pred_region
          %303 = dma.done %s295, 128
        $region40: #{tpu_custom_call.1} parent=35 // pred_fallthru
          _
        %s304 = sand.u32 %s24, 1
        %s305 = scalar_lea.sflag [#allocation10], %s304
        %s306 = sand.u32 %s92, 1
        %s307 = smul.addr %s306, 8
        %s308 = scalar_lea.vmem [#allocation9], %s307
        // Predicated region
        $region41: #{tpu_custom_call.1} parent=35 // pred_check
          %p309 = pneg %p105
        $region42: #{tpu_custom_call.1} parent=35 // pred_check_branch
          %311 = sbr.rel (%p309) target = $region44
        $region43: #{tpu_custom_call.1} parent=35 // pred_region
          %313 = dma.done %s305, 128
        $region44: #{tpu_custom_call.1} parent=35 // pred_fallthru
          _
        %s314 = sand.u32 %s24, 1
        %s315 = scalar_lea.sflag [#allocation10], %s314
        %s316 = sand.u32 %s122, 1
        %s317 = smul.addr %s316, 8
        %s318 = scalar_lea.vmem [#allocation11], %s317
        // Predicated region
        $region45: #{tpu_custom_call.1} parent=35 // pred_check
          %p319 = pneg %p135
        $region46: #{tpu_custom_call.1} parent=35 // pred_check_branch
          %321 = sbr.rel (%p319) target = $region48
        $region47: #{tpu_custom_call.1} parent=35 // pred_region
          %323 = dma.done %s315, 128
        $region48: #{tpu_custom_call.1} parent=35 // pred_fallthru
          _
        %s324 = sand.u32 %s62, 1
        %s325 = scalar_lea.sflag [#allocation7], %s324
        %s326 = sand.u32 %s62, 1
        %s327 = smul.addr %s326, 8
        %s328 = scalar_lea.vmem [#allocation6], %s327
        %p329 = pneg %p75
        %p330 = pneg %p72
        %s331 = sand.u32 %s24, 1
        %s332 = scalar_lea.sflag [#allocation10], %s331
        %s333 = sand.u32 %s92, 1
        %s334 = smul.addr %s333, 8
        %s335 = scalar_lea.vmem [#allocation9], %s334
        %p336 = pneg %p105
        %p337 = pneg %p102
        %s338 = sand.u32 %s24, 1
        %s339 = scalar_lea.sflag [#allocation10], %s338
        %s340 = sand.u32 %s122, 1
        %s341 = smul.addr %s340, 8
        %s342 = scalar_lea.vmem [#allocation11], %s341
        %p343 = pneg %p135
        %p344 = pneg %p132
        %p345 = scmp.lt.s32.totalorder %s30, 1
        %s346 = scalar_select %p345, %s30, 1
        %p347 = scmp.lt.s32.totalorder %s33, 0
        %s348 = scalar_select %p347, %s33, 0
        %s349 = sadd.s32 %s348, %s346
        %s350 = scalar_lea.vmem %s3, %s349
        %p351 = pneg %p163
        %p352 = pneg %p160
        %p353 = pneg %p193
        %p354 = pneg %p190
        %s355 = sand.u32 %s180, 1
        %s356 = scalar_lea.sflag [#allocation8], %s355
        %s357 = sand.u32 %s180, 1
        %s358 = smul.addr %s357, 8
        %s359 = scalar_lea.vmem [#allocation12], %s358
        %p360 = scmp.lt.s32.totalorder %s30, 1
        %s361 = scalar_select %p360, %s30, 1
        %p362 = scmp.lt.s32.totalorder %s33, 0
        %s363 = scalar_select %p362, %s33, 0
        %s364 = sadd.s32 %s363, %s361
        %s365 = scalar_lea.vmem %s3, %s364
        %p366 = scmp.eq.s32.totalorder %s33, 0
        // Predicated region
        $region49: #{tpu_custom_call.1} parent=35 // pred_check
          %p367 = pneg %p366
        $region50: #{tpu_custom_call.1} parent=35 // pred_check_branch
          %369 = sbr.rel (%p367) target = $region52
        $region51: #{tpu_custom_call.1} parent=35 // pred_region
          %v370 = vld [vmem:[%s298] sm:$0xff]
          %v371 = vmul.f32 %v370, 0.25503486
          %vm372 = vcmask 261120
          %373 = vst.msk [vmem:[#allocation2] sm:$0xff] %vm372, %v371
          %374 = vst [vmem:[#allocation3] sm:$0xff] -inf
          %375 = vst [vmem:[#allocation4] sm:$0xff] 0.0
          %376 = vst.msk [vmem:[#allocation5] sm:$0xff] %vm372, 0.0
        $region52: #{tpu_custom_call.1} parent=35 // pred_fallthru
          _
        %v377 = vld [vmem:[%s365] sm:$0x1]
        %v378 = vsub.f32 %v377, 1.0
        %v379 = vmul.f32 %v378, 1442695.0
        %v380 = vld [vmem:[#allocation2] sm:$0xff]
        %v381 = vld [vmem:[%s308] sm:$0xff]
        %v382 = vld [vmem:[%s318] sm:$0xff]
        %v384 = vperm.slane %v379, 0
        %vm386 = vcmask 261120
        %v388 = vsel %vm386, %v380, 0
        %v391 = vsel %vm386, %v381, 0
        %393 = vmatpush.xpose.msra.mxu0 0.0
        %394 = vmatpush.xpose.msra.mxu0 0.0
        %395 = vmatpush.xpose.msra.mxu0 0.0
        %396 = vmatpush.xpose.msra.mxu0 0.0
        %397 = vmatpush.xpose.msra.mxu0 0.0
        %398 = vmatpush.xpose.msra.mxu0 0.0
        %399 = vmatpush.xpose.msra.mxu0 0.0
        %400 = vmatpush.xpose.msra.mxu0 0.0
        %401 = vmatpush.xpose.msra.mxu0 0.0
        %402 = vmatpush.xpose.msra.mxu0 0.0
        %403 = vmatpush.xpose.msra.mxu0 0.0
        %404 = vmatpush.xpose.msra.mxu0 0.0
        %405 = vmatpush.xpose.msra.mxu0 0.0
        %406 = vmatpush.xpose.msra.mxu0 0.0
        %407 = vmatpush.xpose.msra.mxu0 0.0
        %408 = vmatpush.xpose.msra.mxu0 %v391
        %409 = vmatmul.f32.gmra.mxu0 %v388
        %v410 = vpop.f32.mrf.mxu0
        %v411 = vadd.f32 %v384, %v410
        %412 = vdwg.mxu0
        %v413 = vld [vmem:[#allocation3] sm:$0xff]
        %v414 = vld [vmem:[#allocation4] sm:$0xff]
        %vm415 = vcmask 64512
        %v416 = vsel %vm415, %v411, -inf
        %417 = vmax.xlane.f32.xlu0 %v416
        %v418 = vpop.xlane.xlu0 %417
        %v419 = vmax.f32 %v413, %v418
        %v420 = vsub.f32 %v413, %v419
        %v421 = vpow.pop %v420
        %v422 = vsub.f32 %v411, %v419
        %v423 = vpow.pop %v422
        %v424 = vmul.f32 %v421, %v414
        %v425 = vsel %vm415, %v423, 0.0
        %426 = vadd.xlane.f32.xlu0 %v425
        %v427 = vpop.xlane.xlu0 %426
        %v428 = vadd.f32 %v424, %v427
        %429 = vst [vmem:[#allocation4] sm:$0xff] %v428
        %v430 = vld [vmem:[#allocation5] sm:$0xff]
        %v431 = vmul.f32 %v421, %v430
        %v433 = vsel %vm415, %v423, 0
        %435 = vmatpush.msra.mxu0 0.0
        %436 = vmatpush.msra.mxu0 0.0
        %437 = vmatpush.msra.mxu0 0.0
        %438 = vmatpush.msra.mxu0 0.0
        %439 = vmatpush.msra.mxu0 0.0
        %440 = vmatpush.msra.mxu0 0.0
        %441 = vmatpush.msra.mxu0 0.0
        %442 = vmatpush.msra.mxu0 0.0
        %443 = vmatpush.msra.mxu0 0.0
        %444 = vmatpush.msra.mxu0 0.0
        %445 = vmatpush.msra.mxu0 0.0
        %446 = vmatpush.msra.mxu0 0.0
        %447 = vmatpush.msra.mxu0 0.0
        %448 = vmatpush.msra.mxu0 0.0
        %449 = vmatpush.msra.mxu0 0.0
        %450 = vmatpush.msra.mxu0 %v382
        %451 = vmatmul.f32.gmra.mxu0 %v433
        %v452 = vpop.f32.mrf.mxu0
        %v453 = vadd.f32 0.0, %v452
        %454 = vdwg.mxu0
        %v455 = vadd.f32 %v431, %v453
        %456 = vst.msk [vmem:[#allocation5] sm:$0xff] %vm386, %v455
        %457 = vst [vmem:[#allocation3] sm:$0xff] %v419
        // Predicated region
        $region53: #{tpu_custom_call.1} parent=35 // pred_check
          %p458 = pneg %p366
        $region54: #{tpu_custom_call.1} parent=35 // pred_check_branch
          %460 = sbr.rel (%p458) target = $region56
        $region55: #{tpu_custom_call.1} parent=35 // pred_region
          %v461 = vld [vmem:[#allocation4] sm:$0xff]
          %v462 = vrcp.pop %v461
          %v463 = vmul.f32 %v461, %v462
          %v464 = vsub.f32 2.0, %v463
          %v465 = vmul.f32 %v462, %v464
          %v466 = vld [vmem:[#allocation5] sm:$0xff]
          %v467 = vmul.f32 %v466, %v465
          %468 = vst.msk [vmem:[%s359] sm:$0xff] %vm386, %v467
        $region56: #{tpu_custom_call.1} parent=35 // pred_fallthru
          _
        %s469 = sand.u32 %s180, 1
        %s470 = scalar_lea.sflag [#allocation8], %s469
        %s471 = sand.u32 %s180, 1
        %s472 = smul.addr %s471, 8
        %s473 = scalar_lea.vmem [#allocation12], %s472
        // Predicated region
        $region57: #{tpu_custom_call.1} parent=35 // pred_check
          %p474 = pneg %p190
        $region58: #{tpu_custom_call.1} parent=35 // pred_check_branch
          %476 = sbr.rel (%p474) target = $region60
        $region59: #{tpu_custom_call.1} parent=35 // pred_region
          %478 = vsyncadd %s470, 0
          %s479 = sadd.s32 %s32, %s31
          %s480 = smul.addr %s30, 2
          %s481 = sadd.s32 %s479, %s480
          %s482 = smul.addr %s481, 8
          %s483 = scalar_lea.hbm %s4, %s482
          %s485 = sshll.u32 %s473, 4
          %s486 = int_to_ptr.vmem [resolvable:$true] %s485
          %s487 = sshll.u32 %s483, 4
          %s488 = int_to_ptr.hbm [resolvable:$true] %s487
          %490 = dma.vmem_to_hbm [thread:$0]  %s486, 128, %s488, %s470
        $region60: #{tpu_custom_call.1} parent=35 // pred_fallthru
          _
      $region36: #{tpu_custom_call.1} parent=5 // pred_fallthru
        _
      %p491 = scmp.le.s32.totalorder 2, %s19
      // Predicated region
      $region61: #{tpu_custom_call.1} parent=5 // pred_check
        %p492 = pneg %p491
      $region62: #{tpu_custom_call.1} parent=5 // pred_check_branch
        %494 = sbr.rel (%p492) target = $region64
      $region63: #{tpu_custom_call.1} parent=5 // pred_region
        %s495 = ssub.s32 %s19, 2
        // Predicated region
        $region65: #{tpu_custom_call.1} parent=63 // pred_check
          %p496 = pneg %p196
        $region66: #{tpu_custom_call.1} parent=63 // pred_check_branch
          %498 = sbr.rel (%p496) target = $region68
        $region67: #{tpu_custom_call.1} parent=63 // pred_region
          %s499 = sand.u32 %s181, 1
          %s500 = scalar_lea.sflag [#allocation8], %s499
          %s501 = sand.u32 %s181, 1
          %s502 = smul.addr %s501, 8
          %s503 = scalar_lea.vmem [#allocation12], %s502
          %505 = dma.done %s500, 128
        $region68: #{tpu_custom_call.1} parent=63 // pred_fallthru
          _
      $region64: #{tpu_custom_call.1} parent=5 // pred_fallthru
        _
    $region6: #{tpu_custom_call.1} parent=1 // loop_footer
      %s23 = sadd.s32 1, %s19
    $region7: #{tpu_custom_call.1} parent=1 // loop_footer_branch
      %18 = sbr.rel target = $region3
    $region8: #{tpu_custom_call.1} parent=1 // loop_exit
      _
    %506 = vsyncpa [#allocation7], 1
    %s507 = scalar_lea.sflag [#allocation7], 1
    %508 = vsyncpa %s507, 1
    %509 = vsyncpa [#allocation10], 1
    %s510 = scalar_lea.sflag [#allocation10], 1
    %511 = vsyncpa %s510, 1
    %512 = vsyncpa [#allocation8], 1
    %s513 = scalar_lea.sflag [#allocation8], 1
    %514 = vsyncpa %s513, 1

</llo_original>
